<compile_context>
chip_gen: v7x
topology: tpu7x:2x2x1
jax: 0.10.0
libtpu: 0.0.40
codegen_flags: <defaults>
</compile_context>

<pallas_src>
import numpy as np
import jax
import jax.numpy as jnp
from jax.experimental import pallas as pl
from jax.experimental.pallas import tpu as pltpu


# --------------------------------- kernels -----------------------------------
def _kron_kernel(x_ref, m_ref, k_ref, o_ref):
    # out = X_flat @ M + K      (single MXU matmul + VPU add)
    y = jnp.dot(x_ref[...], m_ref[...], preferred_element_type=jnp.float32)
    o_ref[...] = (y + k_ref[...]).astype(o_ref.dtype)


def _plane_kernel(x_ref, a_ref, bt_ref, k_ref, o_ref):
    # out = A @ X @ Bt + K      (per-plane fallback for large images)
    y = jnp.dot(a_ref[...], x_ref[...], preferred_element_type=jnp.float32)
    z = jnp.dot(y, bt_ref[...], preferred_element_type=jnp.float32)
    o_ref[...] = (z + k_ref[...]).astype(o_ref.dtype)


# ----------------------------- constant builders ------------------------------
def _gaussian_kernel1d(ksize: int, sigma: float) -> np.ndarray:
    half = (ksize - 1) * 0.5
    x = np.linspace(-half, half, ksize)
    pdf = np.exp(-0.5 * (x / sigma) ** 2)
    return (pdf / pdf.sum()).astype(np.float32)


def _blur_matrix(n: int, k1d: np.ndarray) -> np.ndarray:
    """(n, n) matrix applying the 1-D kernel with reflect padding (pad=1, ksize=3)."""
    B = np.zeros((n, n), dtype=np.float32)
    for i in range(n):
        for t in (-1, 0, 1):
            p = i + t
            if p < 0:
                p = -p                      # reflect: -1 -> 1
            if p > n - 1:
                p = 2 * (n - 1) - p         # reflect: n -> n-2
            B[i, p] += k1d[t + 1]
    return B


def _masked_selector(n: int, s):
    """Nearest-neighbor one-hot selector with out-of-bounds rows zeroed (traced).

    Matches torchvision F.affine (align_corners=False grid_sample, nearest):
    src = rint((i - c)/s + c), c = (n-1)/2; validity checked on the rounded index
    (grid_sample zeros padding); OOB pixels are supplied by the fill term K.
    """
    c = (n - 1) / 2.0
    idx = jnp.arange(n, dtype=jnp.float32)
    src = jnp.rint((idx - c) / s + c)       # ties-to-even == grid_sample nearbyint
    valid = (src >= 0.0) & (src <= n - 1)
    src_i = jnp.clip(src, 0, n - 1).astype(jnp.int32)
    sel = (src_i[:, None] == jnp.arange(n, dtype=jnp.int32)[None, :]).astype(jnp.float32)
    return sel * valid[:, None].astype(jnp.float32), valid.astype(jnp.float32)


def _build_plane_operator(H: int, W: int, s):
    """Compose blur ∘ nearest-affine ∘ fill into A (H,H), Bt (W,W), K (H,W)."""
    hp = jax.lax.Precision.HIGHEST          # keep composed constants at full f32
    k1d = _gaussian_kernel1d(3, 0.3)
    BH = jnp.asarray(_blur_matrix(H, k1d))  # (H, H)  scale-independent constants
    BW = jnp.asarray(_blur_matrix(W, k1d))  # (W, W)

    Rm, rv = _masked_selector(H, s)         # (H, H), (H,)
    Cm, cv = _masked_selector(W, s)         # (W, W), (W,)

    A = jnp.dot(BH, Rm, precision=hp)       # blur rows ∘ row gather (mask folded)
    Bt = jnp.dot(Cm.T, BW.T, precision=hp)  # col gather ∘ blur cols
    fill = 1.0 - rv[:, None] * cv[None, :]  # OOB region, fill value 1.0
    K = jnp.einsum('ip,pq,jq->ij', BH, fill, BW, precision=hp)  # blurred fill (H, W)
    return A, Bt, K


def _row_block(p: int) -> int:
    """Largest divisor of p that is a multiple of 8 and <= 256 (sublane-aligned rows)."""
    if p <= 8:
        return p
    for cand in range(min(p, 256), 7, -1):
        if cand % 8 == 0 and p % cand == 0:
            return cand
    return p


# ---------------------------------- wrapper -----------------------------------
@jax.jit
def downsize(x: jax.Array, key: jax.Array) -> jax.Array:
    """x: (N, C, H, W) float32 -> (N, C, H, W) float32."""
    N, C, H, W = x.shape
    P, HW = N * C, H * W

    # One scale per forward call (torchvision RandomAffine semantics), stays on device.
    s = jax.random.uniform(key, (), minval=0.8, maxval=1.0)
    A, Bt, K = _build_plane_operator(H, W, s)

    if HW % 128 == 0 and HW <= 1024:
        # ---------- fused single-matmul path (small images) ----------
        # out_flat[p, i*W+j] = sum_ab X_flat[p, a*W+b] * A[i,a]*Bt[b,j] + K[i,j]
        M = jnp.kron(A.T, Bt)                               # (HW, HW)
        Pb = _row_block(P)                                  # row block (sublane-aligned)
        Nb = 128                                            # lane-dense column blocks;
        #  HW/128 >= 2 column blocks -> >=2 parallel grid steps (v7x megacore); 128-wide
        #  N exactly fills v5e's MXU (half-fill per step on v6e/v7x is immaterial at M=Pb rows).
        Kt = jnp.broadcast_to(K.reshape(1, HW), (Pb, HW))   # fill term, tiled over rows
        xf = x.reshape(P, HW)                               # free reshape of NCHW

        grid = (P // Pb, HW // Nb)
        cost = pl.CostEstimate(
            flops=2 * P * HW * HW,
            transcendentals=0,
            bytes_accessed=4 * (2 * P * HW + HW * HW + Pb * HW))

        out = pl.pallas_call(
            _kron_kernel,
            out_shape=jax.ShapeDtypeStruct((P, HW), x.dtype),
            grid_spec=pltpu.PrefetchScalarGridSpec(
                num_scalar_prefetch=0,
                grid=grid,
                in_specs=[
                    pl.BlockSpec((Pb, HW), lambda i, j: (i, 0)),   # X rows (j-invariant)
                    pl.BlockSpec((HW, Nb), lambda i, j: (0, j)),   # M column block
                    pl.BlockSpec((Pb, Nb), lambda i, j: (0, j)),   # fill term block
                ],
                out_specs=pl.BlockSpec((Pb, Nb), lambda i, j: (i, j)),
            ),
            compiler_params=pltpu.CompilerParams(
                dimension_semantics=("parallel", "parallel")),
            cost_estimate=cost,
        )(xf, M, Kt)
        return out.reshape(N, C, H, W)

    # ---------- per-plane two-matmul fallback (large images) ----------
    # Constants are grid-invariant (fixed index_map), X/out blocks are full (H, W)
    # planes so no packing transposes are needed; lane-dense whenever W % 128 == 0.
    xp = x.reshape(P, H, W)
    cost = pl.CostEstimate(
        flops=2 * P * (H * H * W + H * W * W),
        transcendentals=0,
        bytes_accessed=4 * (2 * P * HW + H * H + W * W + HW))

    out = pl.pallas_call(
        _plane_kernel,
        out_shape=jax.ShapeDtypeStruct((P, H, W), x.dtype),
        grid_spec=pltpu.PrefetchScalarGridSpec(
            num_scalar_prefetch=0,
            grid=(P,),
            in_specs=[
                pl.BlockSpec((None, H, W), lambda p: (p, 0, 0)),   # one image plane
                pl.BlockSpec((H, H), lambda p: (0, 0)),            # A (grid-invariant)
                pl.BlockSpec((W, W), lambda p: (0, 0)),            # Bt (grid-invariant)
                pl.BlockSpec((H, W), lambda p: (0, 0)),            # K (grid-invariant)
            ],
            out_specs=pl.BlockSpec((None, H, W), lambda p: (p, 0, 0)),
        ),
        compiler_params=pltpu.CompilerParams(dimension_semantics=("parallel",)),
        cost_estimate=cost,
    )(xp, A, Bt, K)
    return out.reshape(N, C, H, W)


# --------------------------- straightforward reference ------------------------
def _reference_downsize(x, s):
    """Un-fused jnp implementation (gather + blend + separable blur) — plumbing check."""
    N, C, H, W = x.shape

    def nearest_idx(n):
        c = (n - 1) / 2.0
        idx = jnp.arange(n, dtype=jnp.float32)
        src = jnp.rint((idx - c) / s + c)
        valid = (src >= 0.0) & (src <= n - 1)
        return jnp.clip(src, 0, n - 1).astype(jnp.int32), valid

    ri, rvalid = nearest_idx(H)
    ci, cvalid = nearest_idx(W)
    g = x[:, :, ri, :][:, :, :, ci]
    m = (rvalid[:, None] & cvalid[None, :]).astype(x.dtype)
    g = g * m + (1.0 - m)

    k = _gaussian_kernel1d(3, 0.3)
    gp = jnp.concatenate([g[:, :, 1:2, :], g, g[:, :, -2:-1, :]], axis=2)
    g = k[0] * gp[:, :, :-2, :] + k[1] * gp[:, :, 1:-1, :] + k[2] * gp[:, :, 2:, :]
    gp = jnp.concatenate([g[:, :, :, 1:2], g, g[:, :, :, -2:-1]], axis=3)
    g = k[0] * gp[:, :, :, :-2] + k[1] * gp[:, :, :, 1:-1] + k[2] * gp[:, :, :, 2:]
    return g


if __name__ == "__main__":
    key = jax.random.PRNGKey(0)
    k_data, k_aug = jax.random.split(key)
    x = jax.random.uniform(k_data, (2, 4, 16, 16), dtype=jnp.float32)

    y = downsize(x, k_aug)
    jax.block_until_ready(y)

    assert y.shape == x.shape and y.dtype == x.dtype

    # Sanity-check the fused kernel against the straightforward reference (same
    # deterministic scale draw). Tolerance is intentionally loose: default MXU
    # precision for f32 inputs is bf16-pass emulation; the composed operator's
    # weights sum to ~1 so the error stays well inside 1e-2.
    s = jax.random.uniform(k_aug, (), minval=0.8, maxval=1.0)
    y_ref = _reference_downsize(x, s)
    assert jnp.allclose(y, y_ref, atol=1e-2, rtol=1e-2)

    print("KERNEL_OK")
</pallas_src>

<mosaic_0001>
module attributes {stable_mosaic.version = 11 : i64} {
  func.func @_kron_kernel(%arg0: i32, %arg1: i32, %arg2: memref<8x256xf32, #tpu.memory_space<vmem>>, %arg3: memref<256x128xf32, #tpu.memory_space<vmem>>, %arg4: memref<8x128xf32, #tpu.memory_space<vmem>>, %arg5: memref<8x128xf32, #tpu.memory_space<vmem>>) attributes {dimension_semantics = [#tpu.dimension_semantics<parallel>, #tpu.dimension_semantics<parallel>], iteration_bounds = array<i64: 1, 2>, scalar_prefetch = 0 : i64, scratch_operands = 0 : i64, tpu.core_type = #tpu.core_type<tc>, window_params = [{transform_indices = @transform_0, window_bounds = array<i64: 8, 256>}, {transform_indices = @transform_1, window_bounds = array<i64: 256, 128>}, {transform_indices = @transform_2, window_bounds = array<i64: 8, 128>}, {transform_indices = @transform_3, window_bounds = array<i64: 8, 128>}]} {
    %c0 = arith.constant 0 : index
    %c0_0 = arith.constant 0 : index
    %0 = vector.load %arg2[%c0, %c0_0] : memref<8x256xf32, #tpu.memory_space<vmem>>, vector<8x256xf32>
    %c0_1 = arith.constant 0 : index
    %c0_2 = arith.constant 0 : index
    %1 = vector.load %arg3[%c0_1, %c0_2] : memref<256x128xf32, #tpu.memory_space<vmem>>, vector<256x128xf32>
    %cst = arith.constant dense<0.000000e+00> : vector<8x128xf32>
    %2 = tpu.matmul %0, %1, %cst {dimension_numbers = #tpu.dot_dimension_numbers<[1], [0], [0], [1], [0, 0, 1, 1], [], []>} : vector<8x256xf32>, vector<256x128xf32>, vector<8x128xf32> -> vector<8x128xf32>
    %c0_3 = arith.constant 0 : index
    %c0_4 = arith.constant 0 : index
    %3 = vector.load %arg4[%c0_3, %c0_4] : memref<8x128xf32, #tpu.memory_space<vmem>>, vector<8x128xf32>
    %4 = arith.addf %2, %3 : vector<8x128xf32>
    %c0_5 = arith.constant 0 : index
    %c0_6 = arith.constant 0 : index
    %5 = vector.load %arg5[%c0_5, %c0_6] : memref<8x128xf32, #tpu.memory_space<vmem>>, vector<8x128xf32>
    tpu.vector_store %arg5[%c0_5, %c0_6], %4 {strides = array<i32>} : memref<8x128xf32, #tpu.memory_space<vmem>>, vector<8x128xf32>,
    return
  }
  func.func @transform_0(%arg0: i32, %arg1: i32) -> (i32, i32) {
    %c0_i32 = arith.constant 0 : i32
    %c0_i32_0 = arith.constant 0 : i32
    return %arg0, %c0_i32 : i32, i32
  }
  func.func @transform_1(%arg0: i32, %arg1: i32) -> (i32, i32) {
    %c0_i32 = arith.constant 0 : i32
    %c0_i32_0 = arith.constant 0 : i32
    return %c0_i32, %arg1 : i32, i32
  }
  func.func @transform_2(%arg0: i32, %arg1: i32) -> (i32, i32) {
    %c0_i32 = arith.constant 0 : i32
    %c0_i32_0 = arith.constant 0 : i32
    return %c0_i32, %arg1 : i32, i32
  }
  func.func @transform_3(%arg0: i32, %arg1: i32) -> (i32, i32) {
    %c0_i32 = arith.constant 0 : i32
    return %arg0, %arg1 : i32, i32
  }
}

</mosaic_0001>

<llo_original>
// kernel: downsize.1
$region0: #{downsize.1}
  #allocation0 [shape = 'u32[]', space=smem, size = 0x4, offset = 0x4, fixed_abs, tag = 'smem constant byte address 0x4 - core index']
  #allocation1 [shape = 'u32[144,128]{1,0:T(1,128)}', space=vmem, size = 0x12000, scoped, tag = 'internal scratch']
  %s0 = inlined_call_operand.vmem [shape: f32[8,256], index: 0, kind: input, shape index: {}]
  %s1 = inlined_call_operand.vmem [shape: f32[256,256], index: 1, kind: input, shape index: {}]
  %s2 = inlined_call_operand.vmem [shape: f32[8,256], index: 2, kind: input, shape index: {}]
  %s3 = inlined_call_operand.vmem [shape: f32[8,256], index: 3, kind: output, shape index: {}]
  %s4 = sld [smem:[#allocation0]]
  $region83: #{downsize.1} parent=0
    _
  %s6 = ssub.s32 1, %s4
  %s7 = scalar_select 0, %s6, %s4
  $region1: #{downsize.1} parent=0
    #allocation2 [shape = 'u8[262144]{0}', space=vmem, size = 0x40000, scoped, tag = 'input window, operand 1']
    loop: start=0, step=1, limit=4
    $region2: #{downsize.1} parent=1 // loop_pre_header
      _
    $region3: #{downsize.1} parent=1 // loop_header
      %s9 = sphi 0, %s13
      %p10 = scmp.ge.s32.totalorder %s9, 4
      %s16 = sphi 0, %s28
      %s17 = sphi 0, %s24
      %s18 = sphi 0, %s16
      %s19 = sphi 0, %s17
      %s20 = sphi 0, %s18
      %s21 = sphi 0, %s19
      %s31 = sphi 0, %s33
      %s34 = sphi 0, %s31
      %s35 = sphi 0, %s34
      %s51 = sphi 0, %s35
      %s57 = sphi 0, %s59
      %s60 = sphi 0, %s57
      %s61 = sphi 0, %s60
      %s77 = sphi 0, %s61
      %s83 = sphi 0, %s85
      %s86 = sphi 0, %s83
      %s87 = sphi 0, %s86
      %s103 = sphi 0, %s87
      %s111 = sphi 0, %s113
      %s114 = sphi 0, %s111
      %s115 = sphi 0, %s114
      %s131 = sphi 0, %s115
    $region4: #{downsize.1} parent=1 // loop_header_branch
      %12 = sbr.rel (%p10) target = $region8
    $region5: #{downsize.1} parent=1 // loop_body
      %s14 = ssub.s32 %s9, 1
      %s15 = ssub.s32 %s9, 2
      %s22 = sadd.s32 1, %s17
      %p23 = scmp.ge.s32.totalorder %s22, 2
      %s24 = scalar_select %p23, 0, %s22
      %s25 = sadd.s32 1, %s16
      %s26 = scalar_select %p23, %s25, %s16
      %p27 = scmp.ge.s32.totalorder %s26, 1
      %s28 = scalar_select %p27, 0, %s26
      %s29 = ssub.s32 %s16, %s28
      %p30 = scmp.eq.s32.totalorder %s29, 0
      %s32 = sadd.s32 %s31, 1
      %s33 = scalar_select %p30, %s31, %s32
      %p36 = pneg %p30
      %p37 = scmp.eq.s32.totalorder %s9, 1
      %p38 = por %p36, %p37
      %p39 = scmp.ne.s32.totalorder %s31, %s34
      %p40 = scmp.eq.s32.totalorder %s9, 0
      %p41 = por %p39, %p40
      %p42 = scmp.ne.s32.totalorder %s31, %s34
      %p43 = scmp.eq.s32.totalorder %s14, 1
      %p44 = por %p42, %p43
      %p45 = scmp.ne.s32.totalorder %s34, %s35
      %p46 = scmp.eq.s32.totalorder %s14, 0
      %p47 = por %p45, %p46
      %p48 = scmp.ne.s32.totalorder %s34, %s35
      %p49 = scmp.eq.s32.totalorder %s15, 1
      %p50 = por %p48, %p49
      %p52 = scmp.ne.s32.totalorder %s35, %s51
      %p53 = scmp.eq.s32.totalorder %s15, 0
      %p54 = por %p52, %p53
      %s55 = ssub.s32 %s17, %s24
      %p56 = scmp.eq.s32.totalorder %s55, 0
      %s58 = sadd.s32 %s57, 1
      %s59 = scalar_select %p56, %s57, %s58
      %p62 = pneg %p56
      %p63 = scmp.eq.s32.totalorder %s9, 1
      %p64 = por %p62, %p63
      %p65 = scmp.ne.s32.totalorder %s57, %s60
      %p66 = scmp.eq.s32.totalorder %s9, 0
      %p67 = por %p65, %p66
      %p68 = scmp.ne.s32.totalorder %s57, %s60
      %p69 = scmp.eq.s32.totalorder %s14, 1
      %p70 = por %p68, %p69
      %p71 = scmp.ne.s32.totalorder %s60, %s61
      %p72 = scmp.eq.s32.totalorder %s14, 0
      %p73 = por %p71, %p72
      %p74 = scmp.ne.s32.totalorder %s60, %s61
      %p75 = scmp.eq.s32.totalorder %s15, 1
      %p76 = por %p74, %p75
      %p78 = scmp.ne.s32.totalorder %s61, %s77
      %p79 = scmp.eq.s32.totalorder %s15, 0
      %p80 = por %p78, %p79
      %s81 = ssub.s32 %s17, %s24
      %p82 = scmp.eq.s32.totalorder %s81, 0
      %s84 = sadd.s32 %s83, 1
      %s85 = scalar_select %p82, %s83, %s84
      %p88 = pneg %p82
      %p89 = scmp.eq.s32.totalorder %s9, 1
      %p90 = por %p88, %p89
      %p91 = scmp.ne.s32.totalorder %s83, %s86
      %p92 = scmp.eq.s32.totalorder %s9, 0
      %p93 = por %p91, %p92
      %p94 = scmp.ne.s32.totalorder %s83, %s86
      %p95 = scmp.eq.s32.totalorder %s14, 1
      %p96 = por %p94, %p95
      %p97 = scmp.ne.s32.totalorder %s86, %s87
      %p98 = scmp.eq.s32.totalorder %s14, 0
      %p99 = por %p97, %p98
      %p100 = scmp.ne.s32.totalorder %s86, %s87
      %p101 = scmp.eq.s32.totalorder %s15, 1
      %p102 = por %p100, %p101
      %p104 = scmp.ne.s32.totalorder %s87, %s103
      %p105 = scmp.eq.s32.totalorder %s15, 0
      %p106 = por %p104, %p105
      %s107 = ssub.s32 %s16, %s28
      %s108 = ssub.s32 %s17, %s24
      %s109 = sor.u32 %s107, %s108
      %p110 = scmp.eq.s32.totalorder %s109, 0
      %s112 = sadd.s32 %s111, 1
      %s113 = scalar_select %p110, %s111, %s112
      %p116 = pneg %p110
      %p117 = scmp.eq.s32.totalorder %s9, 1
      %p118 = por %p116, %p117
      %p119 = scmp.ne.s32.totalorder %s111, %s114
      %p120 = scmp.eq.s32.totalorder %s9, 0
      %p121 = por %p119, %p120
      %p122 = scmp.ne.s32.totalorder %s111, %s114
      %p123 = scmp.eq.s32.totalorder %s14, 1
      %p124 = por %p122, %p123
      %p125 = scmp.ne.s32.totalorder %s114, %s115
      %p126 = scmp.eq.s32.totalorder %s14, 0
      %p127 = por %p125, %p126
      %p128 = scmp.ne.s32.totalorder %s114, %s115
      %p129 = scmp.eq.s32.totalorder %s15, 1
      %p130 = por %p128, %p129
      %p132 = scmp.ne.s32.totalorder %s115, %s131
      %p133 = scmp.eq.s32.totalorder %s15, 0
      %p134 = por %p132, %p133
      %p135 = scmp.le.s32.totalorder 1, %s9
      %p136 = scmp.lt.s32.totalorder %s9, 3
      %p137 = pnand %p135, %p136
      %p138 = pneg %p137
      // Predicated region
      $region9: #{downsize.1} parent=5 // pred_check
        _
      $region10: #{downsize.1} parent=5 // pred_check_branch
        %140 = sbr.rel (%p137) target = $region12
      $region11: #{downsize.1} parent=5 // pred_region
        %s141 = ssub.s32 %s9, 1
        // Predicated region
        $region13: #{downsize.1} parent=11 // pred_check
          %p142 = pneg %p47
        $region14: #{downsize.1} parent=11 // pred_check_branch
          %144 = sbr.rel (%p142) target = $region16
        $region15: #{downsize.1} parent=11 // pred_region
          %p145 = scmp.lt.s32.totalorder %s18, 0
          %s146 = scalar_select %p145, %s18, 0
          %s147 = smul.addr %s146, 2
          %s148 = smul.addr %s147, 8
          %s149 = scalar_lea.vmem %s0, %s148
        $region16: #{downsize.1} parent=11 // pred_fallthru
          _
      $region12: #{downsize.1} parent=5 // pred_fallthru
        _
      %p150 = scmp.lt.s32.totalorder %s9, 2
      // Predicated region
      $region17: #{downsize.1} parent=5 // pred_check
        %p151 = pneg %p150
      $region18: #{downsize.1} parent=5 // pred_check_branch
        %153 = sbr.rel (%p151) target = $region20
      $region19: #{downsize.1} parent=5 // pred_region
        // Predicated region
        $region21: #{downsize.1} parent=19 // pred_check
          %p154 = pneg %p67
        $region22: #{downsize.1} parent=19 // pred_check_branch
          %156 = sbr.rel (%p154) target = $region24
        $region23: #{downsize.1} parent=19 // pred_region
          %s157 = sand.u32 %s57, 1
          %s158 = sand.u32 %s57, 1
          %s159 = smul.addr %s158, 256
          %s160 = scalar_lea.vmem [#allocation2], %s159
          %s161 = smul.addr %s17, 8
          %s162 = scalar_lea.vmem %s1, %s161
          // Predicated region
          $region25: #{downsize.1} parent=23 // pred_check
            _
          $region26: #{downsize.1} parent=23 // pred_check_branch
            %164 = sbr.rel (0) target = $region28
          $region27: #{downsize.1} parent=23 // pred_region
            // Predicated region
            $region29: #{downsize.1} parent=27 // pred_check
              _
            $region30: #{downsize.1} parent=27 // pred_check_branch
              %166 = sbr.rel (0) target = $region32
            $region31: #{downsize.1} parent=27 // pred_region
              // Predicated region
              $region44: #{downsize.1} parent=31 // pred_check
                _
              $region45: #{downsize.1} parent=31 // pred_check_branch
                %243 = sbr.rel (0) target = $region47
              $region46: #{downsize.1} parent=31 // pred_region
                loop: start=0, step=1, limit=1
                $region48: #{downsize.1} parent=46 // loop_pre_header
                  _
                $region49: #{downsize.1} parent=46 // loop_header
                  %s245 = sphi 0, %s249
                  %p246 = scmp.ge.s32.totalorder %s245, 1
                  %s250 = sphi %s162, %s162
                  %s251 = sphi %s160, %s160
                $region50: #{downsize.1} parent=46 // loop_header_branch
                  %248 = sbr.rel (%p246) target = $region54
                $region51: #{downsize.1} parent=46 // loop_body
                  %v252 = vld [vmem:[%s250] sm:$0xff]
                  %253 = vst [vmem:[%s251] sm:$0xff] %v252
                  %v254 = vld [vmem:[%s250 + $0x10] sm:$0xff]
                  %255 = vst [vmem:[%s251 + $0x8] sm:$0xff] %v254
                  %v256 = vld [vmem:[%s250 + $0x20] sm:$0xff]
                  %257 = vst [vmem:[%s251 + $0x10] sm:$0xff] %v256
                  %v258 = vld [vmem:[%s250 + $0x30] sm:$0xff]
                  %259 = vst [vmem:[%s251 + $0x18] sm:$0xff] %v258
                  %v260 = vld [vmem:[%s250 + $0x40] sm:$0xff]
                  %261 = vst [vmem:[%s251 + $0x20] sm:$0xff] %v260
                  %v262 = vld [vmem:[%s250 + $0x50] sm:$0xff]
                  %263 = vst [vmem:[%s251 + $0x28] sm:$0xff] %v262
                  %v264 = vld [vmem:[%s250 + $0x60] sm:$0xff]
                  %265 = vst [vmem:[%s251 + $0x30] sm:$0xff] %v264
                  %v266 = vld [vmem:[%s250 + $0x70] sm:$0xff]
                  %267 = vst [vmem:[%s251 + $0x38] sm:$0xff] %v266
                  %v268 = vld [vmem:[%s250 + $0x80] sm:$0xff]
                  %269 = vst [vmem:[%s251 + $0x40] sm:$0xff] %v268
                  %v270 = vld [vmem:[%s250 + $0x90] sm:$0xff]
                  %271 = vst [vmem:[%s251 + $0x48] sm:$0xff] %v270
                  %v272 = vld [vmem:[%s250 + $0xa0] sm:$0xff]
                  %273 = vst [vmem:[%s251 + $0x50] sm:$0xff] %v272
                  %v274 = vld [vmem:[%s250 + $0xb0] sm:$0xff]
                  %275 = vst [vmem:[%s251 + $0x58] sm:$0xff] %v274
                  %v276 = vld [vmem:[%s250 + $0xc0] sm:$0xff]
                  %277 = vst [vmem:[%s251 + $0x60] sm:$0xff] %v276
                  %v278 = vld [vmem:[%s250 + $0xd0] sm:$0xff]
                  %279 = vst [vmem:[%s251 + $0x68] sm:$0xff] %v278
                  %v280 = vld [vmem:[%s250 + $0xe0] sm:$0xff]
                  %281 = vst [vmem:[%s251 + $0x70] sm:$0xff] %v280
                  %v282 = vld [vmem:[%s250 + $0xf0] sm:$0xff]
                  %283 = vst [vmem:[%s251 + $0x78] sm:$0xff] %v282
                  %v284 = vld [vmem:[%s250 + $0x100] sm:$0xff]
                  %285 = vst [vmem:[%s251 + $0x80] sm:$0xff] %v284
                  %v286 = vld [vmem:[%s250 + $0x110] sm:$0xff]
                  %287 = vst [vmem:[%s251 + $0x88] sm:$0xff] %v286
                  %v288 = vld [vmem:[%s250 + $0x120] sm:$0xff]
                  %289 = vst [vmem:[%s251 + $0x90] sm:$0xff] %v288
                  %v290 = vld [vmem:[%s250 + $0x130] sm:$0xff]
                  %291 = vst [vmem:[%s251 + $0x98] sm:$0xff] %v290
                  %v292 = vld [vmem:[%s250 + $0x140] sm:$0xff]
                  %293 = vst [vmem:[%s251 + $0xa0] sm:$0xff] %v292
                  %v294 = vld [vmem:[%s250 + $0x150] sm:$0xff]
                  %295 = vst [vmem:[%s251 + $0xa8] sm:$0xff] %v294
                  %v296 = vld [vmem:[%s250 + $0x160] sm:$0xff]
                  %297 = vst [vmem:[%s251 + $0xb0] sm:$0xff] %v296
                  %v298 = vld [vmem:[%s250 + $0x170] sm:$0xff]
                  %299 = vst [vmem:[%s251 + $0xb8] sm:$0xff] %v298
                  %v300 = vld [vmem:[%s250 + $0x180] sm:$0xff]
                  %301 = vst [vmem:[%s251 + $0xc0] sm:$0xff] %v300
                  %v302 = vld [vmem:[%s250 + $0x190] sm:$0xff]
                  %303 = vst [vmem:[%s251 + $0xc8] sm:$0xff] %v302
                  %v304 = vld [vmem:[%s250 + $0x1a0] sm:$0xff]
                  %305 = vst [vmem:[%s251 + $0xd0] sm:$0xff] %v304
                  %v306 = vld [vmem:[%s250 + $0x1b0] sm:$0xff]
                  %307 = vst [vmem:[%s251 + $0xd8] sm:$0xff] %v306
                  %v308 = vld [vmem:[%s250 + $0x1c0] sm:$0xff]
                  %309 = vst [vmem:[%s251 + $0xe0] sm:$0xff] %v308
                  %v310 = vld [vmem:[%s250 + $0x1d0] sm:$0xff]
                  %311 = vst [vmem:[%s251 + $0xe8] sm:$0xff] %v310
                  %v312 = vld [vmem:[%s250 + $0x1e0] sm:$0xff]
                  %313 = vst [vmem:[%s251 + $0xf0] sm:$0xff] %v312
                  %v314 = vld [vmem:[%s250 + $0x1f0] sm:$0xff]
                  %315 = vst [vmem:[%s251 + $0xf8] sm:$0xff] %v314
                $region52: #{downsize.1} parent=46 // loop_footer
                  %s249 = sadd.s32 1, %s245
                $region53: #{downsize.1} parent=46 // loop_footer_branch
                  %244 = sbr.rel target = $region49
                $region54: #{downsize.1} parent=46 // loop_exit
                  _
              $region47: #{downsize.1} parent=31 // pred_fallthru
                _
              // Predicated region
              $region55: #{downsize.1} parent=31 // pred_check
                _
              $region56: #{downsize.1} parent=31 // pred_check_branch
                %317 = sbr.rel target = $region58
              $region57: #{downsize.1} parent=31 // pred_region
                _
              $region58: #{downsize.1} parent=31 // pred_fallthru
                _
            $region32: #{downsize.1} parent=27 // pred_fallthru
              _
            // Predicated region
            $region33: #{downsize.1} parent=27 // pred_check
              _
            $region34: #{downsize.1} parent=27 // pred_check_branch
              %168 = sbr.rel target = $region36
            $region35: #{downsize.1} parent=27 // pred_region
              loop: start=0, step=1, limit=1
              $region37: #{downsize.1} parent=35 // loop_pre_header
                _
              $region38: #{downsize.1} parent=35 // loop_header
                %s171 = sphi 0, %s175
                %p172 = scmp.ge.s32.totalorder %s171, 1
                %s176 = sphi %s162, %s162
                %s177 = sphi %s160, %s160
              $region39: #{downsize.1} parent=35 // loop_header_branch
                %174 = sbr.rel (%p172) target = $region43
              $region40: #{downsize.1} parent=35 // loop_body
                %v178 = vld [vmem:[%s176] sm:$0xff]
                %179 = vst [vmem:[%s177] sm:$0xff] %v178
                %v180 = vld [vmem:[%s176 + $0x10] sm:$0xff]
                %181 = vst [vmem:[%s177 + $0x8] sm:$0xff] %v180
                %v182 = vld [vmem:[%s176 + $0x20] sm:$0xff]
                %183 = vst [vmem:[%s177 + $0x10] sm:$0xff] %v182
                %v184 = vld [vmem:[%s176 + $0x30] sm:$0xff]
                %185 = vst [vmem:[%s177 + $0x18] sm:$0xff] %v184
                %v186 = vld [vmem:[%s176 + $0x40] sm:$0xff]
                %187 = vst [vmem:[%s177 + $0x20] sm:$0xff] %v186
                %v188 = vld [vmem:[%s176 + $0x50] sm:$0xff]
                %189 = vst [vmem:[%s177 + $0x28] sm:$0xff] %v188
                %v190 = vld [vmem:[%s176 + $0x60] sm:$0xff]
                %191 = vst [vmem:[%s177 + $0x30] sm:$0xff] %v190
                %v192 = vld [vmem:[%s176 + $0x70] sm:$0xff]
                %193 = vst [vmem:[%s177 + $0x38] sm:$0xff] %v192
                %v194 = vld [vmem:[%s176 + $0x80] sm:$0xff]
                %195 = vst [vmem:[%s177 + $0x40] sm:$0xff] %v194
                %v196 = vld [vmem:[%s176 + $0x90] sm:$0xff]
                %197 = vst [vmem:[%s177 + $0x48] sm:$0xff] %v196
                %v198 = vld [vmem:[%s176 + $0xa0] sm:$0xff]
                %199 = vst [vmem:[%s177 + $0x50] sm:$0xff] %v198
                %v200 = vld [vmem:[%s176 + $0xb0] sm:$0xff]
                %201 = vst [vmem:[%s177 + $0x58] sm:$0xff] %v200
                %v202 = vld [vmem:[%s176 + $0xc0] sm:$0xff]
                %203 = vst [vmem:[%s177 + $0x60] sm:$0xff] %v202
                %v204 = vld [vmem:[%s176 + $0xd0] sm:$0xff]
                %205 = vst [vmem:[%s177 + $0x68] sm:$0xff] %v204
                %v206 = vld [vmem:[%s176 + $0xe0] sm:$0xff]
                %207 = vst [vmem:[%s177 + $0x70] sm:$0xff] %v206
                %v208 = vld [vmem:[%s176 + $0xf0] sm:$0xff]
                %209 = vst [vmem:[%s177 + $0x78] sm:$0xff] %v208
                %v210 = vld [vmem:[%s176 + $0x100] sm:$0xff]
                %211 = vst [vmem:[%s177 + $0x80] sm:$0xff] %v210
                %v212 = vld [vmem:[%s176 + $0x110] sm:$0xff]
                %213 = vst [vmem:[%s177 + $0x88] sm:$0xff] %v212
                %v214 = vld [vmem:[%s176 + $0x120] sm:$0xff]
                %215 = vst [vmem:[%s177 + $0x90] sm:$0xff] %v214
                %v216 = vld [vmem:[%s176 + $0x130] sm:$0xff]
                %217 = vst [vmem:[%s177 + $0x98] sm:$0xff] %v216
                %v218 = vld [vmem:[%s176 + $0x140] sm:$0xff]
                %219 = vst [vmem:[%s177 + $0xa0] sm:$0xff] %v218
                %v220 = vld [vmem:[%s176 + $0x150] sm:$0xff]
                %221 = vst [vmem:[%s177 + $0xa8] sm:$0xff] %v220
                %v222 = vld [vmem:[%s176 + $0x160] sm:$0xff]
                %223 = vst [vmem:[%s177 + $0xb0] sm:$0xff] %v222
                %v224 = vld [vmem:[%s176 + $0x170] sm:$0xff]
                %225 = vst [vmem:[%s177 + $0xb8] sm:$0xff] %v224
                %v226 = vld [vmem:[%s176 + $0x180] sm:$0xff]
                %227 = vst [vmem:[%s177 + $0xc0] sm:$0xff] %v226
                %v228 = vld [vmem:[%s176 + $0x190] sm:$0xff]
                %229 = vst [vmem:[%s177 + $0xc8] sm:$0xff] %v228
                %v230 = vld [vmem:[%s176 + $0x1a0] sm:$0xff]
                %231 = vst [vmem:[%s177 + $0xd0] sm:$0xff] %v230
                %v232 = vld [vmem:[%s176 + $0x1b0] sm:$0xff]
                %233 = vst [vmem:[%s177 + $0xd8] sm:$0xff] %v232
                %v234 = vld [vmem:[%s176 + $0x1c0] sm:$0xff]
                %235 = vst [vmem:[%s177 + $0xe0] sm:$0xff] %v234
                %v236 = vld [vmem:[%s176 + $0x1d0] sm:$0xff]
                %237 = vst [vmem:[%s177 + $0xe8] sm:$0xff] %v236
                %v238 = vld [vmem:[%s176 + $0x1e0] sm:$0xff]
                %239 = vst [vmem:[%s177 + $0xf0] sm:$0xff] %v238
                %v240 = vld [vmem:[%s176 + $0x1f0] sm:$0xff]
                %241 = vst [vmem:[%s177 + $0xf8] sm:$0xff] %v240
              $region41: #{downsize.1} parent=35 // loop_footer
                %s175 = sadd.s32 1, %s171
              $region42: #{downsize.1} parent=35 // loop_footer_branch
                %170 = sbr.rel target = $region38
              $region43: #{downsize.1} parent=35 // loop_exit
                _
            $region36: #{downsize.1} parent=27 // pred_fallthru
              _
          $region28: #{downsize.1} parent=23 // pred_fallthru
            _
          %318 = vnop
        $region24: #{downsize.1} parent=19 // pred_fallthru
          _
        // Predicated region
        $region59: #{downsize.1} parent=19 // pred_check
          %p319 = pneg %p93
        $region60: #{downsize.1} parent=19 // pred_check_branch
          %321 = sbr.rel (%p319) target = $region62
        $region61: #{downsize.1} parent=19 // pred_region
          %p322 = scmp.lt.s32.totalorder %s17, 1
          %s323 = scalar_select %p322, %s17, 1
          %s324 = smul.addr %s323, 8
          %s325 = scalar_lea.vmem %s2, %s324
        $region62: #{downsize.1} parent=19 // pred_fallthru
          _
      $region20: #{downsize.1} parent=5 // pred_fallthru
        _
      %p326 = scmp.le.s32.totalorder 1, %s9
      %p327 = scmp.lt.s32.totalorder %s9, 3
      %p328 = pnand %p326, %p327
      %p329 = pneg %p328
      // Predicated region
      $region63: #{downsize.1} parent=5 // pred_check
        _
      $region64: #{downsize.1} parent=5 // pred_check_branch
        %331 = sbr.rel (%p328) target = $region66
      $region65: #{downsize.1} parent=5 // pred_region
        %s332 = ssub.s32 %s9, 1
        %s333 = sand.u32 %s60, 1
        %s334 = sand.u32 %s60, 1
        %s335 = smul.addr %s334, 256
        %s336 = scalar_lea.vmem [#allocation2], %s335
        // Predicated region
        $region67: #{downsize.1} parent=65 // pred_check
          %p337 = pneg %p73
        $region68: #{downsize.1} parent=65 // pred_check_branch
          %339 = sbr.rel (%p337) target = $region70
        $region69: #{downsize.1} parent=65 // pred_region
          _
        $region70: #{downsize.1} parent=65 // pred_fallthru
          _
        %p340 = scmp.lt.s32.totalorder %s18, 0
        %s341 = scalar_select %p340, %s18, 0
        %s342 = smul.addr %s341, 2
        %s343 = smul.addr %s342, 8
        %s344 = scalar_lea.vmem %s0, %s343
        %p345 = pneg %p47
        %p346 = pneg %p44
        %s347 = sand.u32 %s60, 1
        %s348 = sand.u32 %s60, 1
        %s349 = smul.addr %s348, 256
        %s350 = scalar_lea.vmem [#allocation2], %s349
        %p351 = pneg %p73
        %p352 = pneg %p70
        %p353 = scmp.lt.s32.totalorder %s19, 1
        %s354 = scalar_select %p353, %s19, 1
        %s355 = smul.addr %s354, 8
        %s356 = scalar_lea.vmem %s2, %s355
        %p357 = pneg %p99
        %p358 = pneg %p96
        %p359 = pneg %p127
        %p360 = pneg %p124
        %p361 = scmp.lt.s32.totalorder %s18, 0
        %s362 = scalar_select %p361, %s18, 0
        %p363 = scmp.lt.s32.totalorder %s19, 1
        %s364 = scalar_select %p363, %s19, 1
        %s365 = smul.addr %s362, 2
        %s366 = sadd.s32 %s364, %s365
        %s367 = smul.addr %s366, 8
        %s368 = scalar_lea.vmem %s3, %s367
        %p369 = scmp.lt.s32.totalorder %s18, 0
        %s370 = scalar_select %p369, %s18, 0
        %s371 = smul.addr %s370, 2
        %s372 = smul.addr %s371, 8
        %s373 = scalar_lea.vmem %s0, %s372
        %p374 = scmp.lt.s32.totalorder %s19, 1
        %s375 = scalar_select %p374, %s19, 1
        %s376 = smul.addr %s375, 8
        %s377 = scalar_lea.vmem %s2, %s376
        %p378 = scmp.lt.s32.totalorder %s18, 0
        %s379 = scalar_select %p378, %s18, 0
        %p380 = scmp.lt.s32.totalorder %s19, 1
        %s381 = scalar_select %p380, %s19, 1
        %s382 = smul.addr %s379, 2
        %s383 = sadd.s32 %s381, %s382
        %s384 = smul.addr %s383, 8
        %s385 = scalar_lea.vmem %s3, %s384
        %v386 = vld [vmem:[%s373] sm:$0xff]
        %v387 = vld [vmem:[%s373 + $0x8] sm:$0xff]
        %v388 = vld [vmem:[%s336] sm:$0xff]
        %v389 = vld [vmem:[%s336 + $0x8] sm:$0xff]
        %v390 = vld [vmem:[%s336 + $0x10] sm:$0xff]
        %v391 = vld [vmem:[%s336 + $0x18] sm:$0xff]
        %v392 = vld [vmem:[%s336 + $0x20] sm:$0xff]
        %v393 = vld [vmem:[%s336 + $0x28] sm:$0xff]
        %v394 = vld [vmem:[%s336 + $0x30] sm:$0xff]
        %v395 = vld [vmem:[%s336 + $0x38] sm:$0xff]
        %v396 = vld [vmem:[%s336 + $0x40] sm:$0xff]
        %v397 = vld [vmem:[%s336 + $0x48] sm:$0xff]
        %v398 = vld [vmem:[%s336 + $0x50] sm:$0xff]
        %v399 = vld [vmem:[%s336 + $0x58] sm:$0xff]
        %v400 = vld [vmem:[%s336 + $0x60] sm:$0xff]
        %v401 = vld [vmem:[%s336 + $0x68] sm:$0xff]
        %v402 = vld [vmem:[%s336 + $0x70] sm:$0xff]
        %v403 = vld [vmem:[%s336 + $0x78] sm:$0xff]
        %v404 = vld [vmem:[%s336 + $0x80] sm:$0xff]
        %v405 = vld [vmem:[%s336 + $0x88] sm:$0xff]
        %v406 = vld [vmem:[%s336 + $0x90] sm:$0xff]
        %v407 = vld [vmem:[%s336 + $0x98] sm:$0xff]
        %v408 = vld [vmem:[%s336 + $0xa0] sm:$0xff]
        %v409 = vld [vmem:[%s336 + $0xa8] sm:$0xff]
        %v410 = vld [vmem:[%s336 + $0xb0] sm:$0xff]
        %v411 = vld [vmem:[%s336 + $0xb8] sm:$0xff]
        %v412 = vld [vmem:[%s336 + $0xc0] sm:$0xff]
        %v413 = vld [vmem:[%s336 + $0xc8] sm:$0xff]
        %v414 = vld [vmem:[%s336 + $0xd0] sm:$0xff]
        %v415 = vld [vmem:[%s336 + $0xd8] sm:$0xff]
        %v416 = vld [vmem:[%s336 + $0xe0] sm:$0xff]
        %v417 = vld [vmem:[%s336 + $0xe8] sm:$0xff]
        %v418 = vld [vmem:[%s336 + $0xf0] sm:$0xff]
        %v419 = vld [vmem:[%s336 + $0xf8] sm:$0xff]
        %v420 = vld [vmem:[%s377] sm:$0xff]
        %421 = vmatprep.subr.mxu0 0.0
        %422 = vmatpush1.msra.mxu0 %v388
        %423 = vmatprep.subr.mxu0 0.0
        %424 = vmatpush1.msra.mxu0 %v389
        %425 = vmatprep.subr.mxu0 0.0
        %426 = vmatpush1.msra.mxu0 %v390
        %427 = vmatprep.subr.mxu0 0.0
        %428 = vmatpush1.msra.mxu0 %v391
        %429 = vmatprep.subr.mxu0 0.0
        %430 = vmatpush1.msra.mxu0 %v392
        %431 = vmatprep.subr.mxu0 0.0
        %432 = vmatpush1.msra.mxu0 %v393
        %433 = vmatprep.subr.mxu0 0.0
        %434 = vmatpush1.msra.mxu0 %v394
        %435 = vmatprep.subr.mxu0 0.0
        %436 = vmatpush1.msra.mxu0 %v395
        %437 = vmatprep.subr.mxu0 0.0
        %438 = vmatpush1.msra.mxu0 %v396
        %439 = vmatprep.subr.mxu0 0.0
        %440 = vmatpush1.msra.mxu0 %v397
        %441 = vmatprep.subr.mxu0 0.0
        %442 = vmatpush1.msra.mxu0 %v398
        %443 = vmatprep.subr.mxu0 0.0
        %444 = vmatpush1.msra.mxu0 %v399
        %445 = vmatprep.subr.mxu0 0.0
        %446 = vmatpush1.msra.mxu0 %v400
        %447 = vmatprep.subr.mxu0 0.0
        %448 = vmatpush1.msra.mxu0 %v401
        %449 = vmatprep.subr.mxu0 0.0
        %450 = vmatpush1.msra.mxu0 %v402
        %451 = vmatprep.subr.mxu0 0.0
        %452 = vmatpush1.msra.mxu0 %v403
        %453 = vmatprep.subr.mxu0 0.0
        %454 = vmatpush1.msra.mxu0 %v404
        %455 = vmatprep.subr.mxu0 0.0
        %456 = vmatpush1.msra.mxu0 %v405
        %457 = vmatprep.subr.mxu0 0.0
        %458 = vmatpush1.msra.mxu0 %v406
        %459 = vmatprep.subr.mxu0 0.0
        %460 = vmatpush1.msra.mxu0 %v407
        %461 = vmatprep.subr.mxu0 0.0
        %462 = vmatpush1.msra.mxu0 %v408
        %463 = vmatprep.subr.mxu0 0.0
        %464 = vmatpush1.msra.mxu0 %v409
        %465 = vmatprep.subr.mxu0 0.0
        %466 = vmatpush1.msra.mxu0 %v410
        %467 = vmatprep.subr.mxu0 0.0
        %468 = vmatpush1.msra.mxu0 %v411
        %469 = vmatprep.subr.mxu0 0.0
        %470 = vmatpush1.msra.mxu0 %v412
        %471 = vmatprep.subr.mxu0 0.0
        %472 = vmatpush1.msra.mxu0 %v413
        %473 = vmatprep.subr.mxu0 0.0
        %474 = vmatpush1.msra.mxu0 %v414
        %475 = vmatprep.subr.mxu0 0.0
        %476 = vmatpush1.msra.mxu0 %v415
        %477 = vmatprep.subr.mxu0 0.0
        %478 = vmatpush1.msra.mxu0 %v416
        %479 = vmatprep.subr.mxu0 0.0
        %480 = vmatpush1.msra.mxu0 %v417
        %481 = vmatprep.subr.mxu0 0.0
        %482 = vmatpush1.msra.mxu0 %v418
        %483 = vmatprep.subr.mxu0 0.0
        %484 = vmatpush1.msra.mxu0 %v419
        %485 = vmatprep.mubr.f32.mxu0 %v387
        %486 = vmatmul.mubr.f32.gmra.mrb[0].mxu0 %v386
        %v487 = vpop.f32.mrb[0].mxu0
        %v488 = vadd.f32 %v420, %v487
        %v489 = vpop.f32.mrb[0].mxu0
        %490 = vdwg.mxu0
        %491 = vst [vmem:[%s385] sm:$0xff] %v488
        %p492 = scmp.lt.s32.totalorder %s18, 0
        %s493 = scalar_select %p492, %s18, 0
        %p494 = scmp.lt.s32.totalorder %s19, 1
        %s495 = scalar_select %p494, %s19, 1
        %s496 = smul.addr %s493, 2
        %s497 = sadd.s32 %s495, %s496
        %s498 = smul.addr %s497, 8
        %s499 = scalar_lea.vmem %s3, %s498
        // Predicated region
        $region71: #{downsize.1} parent=65 // pred_check
          %p500 = pneg %p124
        $region72: #{downsize.1} parent=65 // pred_check_branch
          %502 = sbr.rel (%p500) target = $region74
        $region73: #{downsize.1} parent=65 // pred_region
          _
        $region74: #{downsize.1} parent=65 // pred_fallthru
          _
      $region66: #{downsize.1} parent=5 // pred_fallthru
        _
      %p503 = scmp.le.s32.totalorder 2, %s9
      // Predicated region
      $region75: #{downsize.1} parent=5 // pred_check
        %p504 = pneg %p503
      $region76: #{downsize.1} parent=5 // pred_check_branch
        %506 = sbr.rel (%p504) target = $region78
      $region77: #{downsize.1} parent=5 // pred_region
        %s507 = ssub.s32 %s9, 2
        // Predicated region
        $region79: #{downsize.1} parent=77 // pred_check
          %p508 = pneg %p130
        $region80: #{downsize.1} parent=77 // pred_check_branch
          %510 = sbr.rel (%p508) target = $region82
        $region81: #{downsize.1} parent=77 // pred_region
          %p511 = scmp.lt.s32.totalorder %s20, 0
          %s512 = scalar_select %p511, %s20, 0
          %p513 = scmp.lt.s32.totalorder %s21, 1
          %s514 = scalar_select %p513, %s21, 1
          %s515 = smul.addr %s512, 2
          %s516 = sadd.s32 %s514, %s515
          %s517 = smul.addr %s516, 8
          %s518 = scalar_lea.vmem %s3, %s517
        $region82: #{downsize.1} parent=77 // pred_fallthru
          _
      $region78: #{downsize.1} parent=5 // pred_fallthru
        _
    $region6: #{downsize.1} parent=1 // loop_footer
      %s13 = sadd.s32 1, %s9
    $region7: #{downsize.1} parent=1 // loop_footer_branch
      %8 = sbr.rel target = $region3
    $region8: #{downsize.1} parent=1 // loop_exit
      _

</llo_original>
